<compile_context>
chip_gen: v7x
topology: tpu7x:2x2x1
jax: 0.10.0
libtpu: 0.0.40
codegen_flags: <defaults>
</compile_context>

<pallas_src>
import functools

import jax
import jax.numpy as jnp
from jax import lax
from jax.experimental import pallas as pl
from jax.experimental.pallas import tpu as pltpu


_TARGET_BLOCK_BYTES = 2 * 1024 * 1024  # ~2 MiB input block: ~86% HBM roofline,
                                        # pipelined footprint fits all scoped-
                                        # VMEM defaults (incl. v7x's 64 MiB/TC).


def _cdiv(a, b):
    return -(-a // b)


def _round_up(x, n):
    return _cdiv(x, n) * n


# --------------------------------------------------------------------------
# Kernels
# --------------------------------------------------------------------------
def _ln_channels_last_kernel(x_ref, w_ref, b_ref, o_ref, *, eps):
    """x_ref: (tm, C). Normalize each row over the lane (C) axis."""
    x = x_ref[...].astype(jnp.float32)            # (tm, C)
    w = w_ref[...].astype(jnp.float32)            # (1, C)   loaded once/block
    b = b_ref[...].astype(jnp.float32)            # (1, C)
    mean = jnp.mean(x, axis=-1, keepdims=True)    # XLU cross-lane reduce
    xc = x - mean
    var = jnp.mean(xc * xc, axis=-1, keepdims=True)
    inv = lax.rsqrt(var + eps)                    # EUP
    o_ref[...] = (xc * inv * w + b).astype(o_ref.dtype)


def _ln_channels_first_kernel(x_ref, w_ref, b_ref, o_ref, *, eps):
    """x_ref: (Bt, C, ts). Normalize over the channel axis (axis=1)."""
    x = x_ref[...].astype(jnp.float32)            # (Bt, C, ts)
    w = w_ref[...].astype(jnp.float32)            # (1, C, 1)
    b = b_ref[...].astype(jnp.float32)            # (1, C, 1)
    mean = jnp.mean(x, axis=1, keepdims=True)     # sublane reduce per lane
    xc = x - mean
    var = jnp.mean(xc * xc, axis=1, keepdims=True)
    inv = lax.rsqrt(var + eps)                    # EUP
    o_ref[...] = (xc * inv * w + b).astype(o_ref.dtype)


# --------------------------------------------------------------------------
# Byte-aware tiling helpers (cdiv grids; ragged tails are masked by Pallas)
# --------------------------------------------------------------------------
def _pick_row_tile(m, row_bytes, target_bytes=_TARGET_BLOCK_BYTES):
    """Row tile (multiple of 8) for a cdiv grid over m rows (channels_last).

    Targets ~target_bytes per input block; prefers >=2 (and an even number of)
    grid steps so both v7x TensorCores get work.
    """
    if m <= 8:
        return m                                       # full-extent block
    ideal = max(8, (target_bytes // max(row_bytes, 1)) // 8 * 8)
    steps = max(2, _cdiv(m, ideal))
    if steps % 2 and (steps + 1) * 8 <= _round_up(m, 8):
        steps += 1                                     # prefer even step count
    t = _round_up(_cdiv(m, steps), 8)
    if t >= m:
        return m
    return t


def _pick_cf_tiles(batch, c, s, itemsize, target_bytes=_TARGET_BLOCK_BYTES):
    """(Bt, ts) for channels_first blocks of shape (Bt, C, ts)."""
    col_bytes = c * itemsize                           # bytes / spatial column
    if s < 128 or s * col_bytes <= target_bytes:
        ts = s                                         # full extent: legal for
        #                                               any s; small s is then
        #                                               amortized via Bt below
    else:
        ts = max(128, min((target_bytes // col_bytes) // 128 * 128,
                          (s // 128) * 128))           # lane-dense 128-multiple
    bt = max(1, min(batch, target_bytes // max(ts * col_bytes, 1)))
    # keep >= 2 grid steps when there is enough work (v7x megacore)
    if _cdiv(batch, bt) * _cdiv(s, ts) < 2 and batch >= 2:
        bt = _cdiv(batch, 2)
    return bt, ts


# --------------------------------------------------------------------------
# Wrapper (forward semantics of LayerNorm in clusterformer.py)
# --------------------------------------------------------------------------
def layer_norm(x, weight, bias, *, eps=1e-6, data_format="channels_last"):
    itemsize = jnp.dtype(x.dtype).itemsize

    if data_format == "channels_last":
        C = x.shape[-1]
        m = 1
        for d in x.shape[:-1]:
            m *= d
        x2 = x.reshape(m, C)                           # contiguous -> free
        w2 = weight.reshape(1, C)
        b2 = bias.reshape(1, C)
        tm = _pick_row_tile(m, C * itemsize)
        out = pl.pallas_call(
            functools.partial(_ln_channels_last_kernel, eps=eps),
            out_shape=jax.ShapeDtypeStruct((m, C), x.dtype),
            grid=(_cdiv(m, tm),),
            in_specs=[
                pl.BlockSpec((tm, C), lambda i: (i, 0)),
                pl.BlockSpec((1, C), lambda i: (0, 0)),
                pl.BlockSpec((1, C), lambda i: (0, 0)),
            ],
            out_specs=pl.BlockSpec((tm, C), lambda i: (i, 0)),
            compiler_params=pltpu.CompilerParams(
                dimension_semantics=("parallel",)),
        )(x2, w2, b2)
        return out.reshape(x.shape)

    elif data_format == "channels_first":
        B, C = x.shape[0], x.shape[1]
        s = 1
        for d in x.shape[2:]:
            s *= d
        x3 = x.reshape(B, C, s)                        # contiguous, NO transpose
        w3 = weight.reshape(1, C, 1)
        b3 = bias.reshape(1, C, 1)
        bt, ts = _pick_cf_tiles(B, C, s, itemsize)
        nb = _cdiv(B, bt)
        nj = _cdiv(s, ts)

        def x_map(i, nj=nj):                           # flattened parallel grid
            return (i // nj, 0, i % nj)

        out = pl.pallas_call(
            functools.partial(_ln_channels_first_kernel, eps=eps),
            out_shape=jax.ShapeDtypeStruct((B, C, s), x.dtype),
            grid=(nb * nj,),
            in_specs=[
                pl.BlockSpec((bt, C, ts), x_map),
                pl.BlockSpec((1, C, 1), lambda i: (0, 0, 0)),
                pl.BlockSpec((1, C, 1), lambda i: (0, 0, 0)),
            ],
            out_specs=pl.BlockSpec((bt, C, ts), x_map),
            compiler_params=pltpu.CompilerParams(
                dimension_semantics=("parallel",)),
        )(x3, w3, b3)
        return out.reshape(x.shape)

    else:
        raise NotImplementedError(data_format)


# --------------------------------------------------------------------------
# Pure-JAX references (validation)
# --------------------------------------------------------------------------
def _ref_channels_last(x, w, b, eps):
    mean = x.mean(axis=-1, keepdims=True)
    var = ((x - mean) ** 2).mean(axis=-1, keepdims=True)
    return (x - mean) / jnp.sqrt(var + eps) * w + b


def _ref_channels_first(x, w, b, eps):
    u = x.mean(axis=1, keepdims=True)
    s = ((x - u) ** 2).mean(axis=1, keepdims=True)
    xn = (x - u) / jnp.sqrt(s + eps)
    return w[None, :, None, None] * xn + b[None, :, None, None]


if __name__ == "__main__":
    eps = 1e-6
    key = jax.random.PRNGKey(0)
    k1, k2, k3, k4, k5, k6 = jax.random.split(key, 6)

    # ---- primary shapes (lane-dense C) -------------------------------------
    B, H, W, C = 2, 16, 16, 128
    weight = 1.0 + 0.1 * jax.random.normal(k1, (C,), jnp.float32)
    bias = 0.1 * jax.random.normal(k2, (C,), jnp.float32)

    x_last = jax.random.normal(k3, (B, H, W, C), jnp.float32)
    out_last = jax.block_until_ready(
        layer_norm(x_last, weight, bias, eps=eps, data_format="channels_last"))
    ref_last = _ref_channels_last(x_last, weight, bias, eps)
    assert out_last.shape == x_last.shape
    assert jnp.allclose(out_last, ref_last, atol=1e-5, rtol=1e-5)

    x_first = jax.random.normal(k4, (B, C, H, W), jnp.float32)
    out_first = jax.block_until_ready(
        layer_norm(x_first, weight, bias, eps=eps, data_format="channels_first"))
    ref_first = _ref_channels_first(x_first, weight, bias, eps)
    assert out_first.shape == x_first.shape
    assert jnp.allclose(out_first, ref_first, atol=1e-5, rtol=1e-5)

    # ---- ragged shapes: exercise the cdiv / masked-tail grid paths ---------
    C2 = 96
    w_r = 1.0 + 0.1 * jax.random.normal(k5, (C2,), jnp.float32)
    b_r = 0.1 * jax.random.normal(k6, (C2,), jnp.float32)

    x_rl = jax.random.normal(k3, (2, 7, 7, C2), jnp.float32)   # m = 98 rows
    o_rl = jax.block_until_ready(
        layer_norm(x_rl, w_r, b_r, eps=eps, data_format="channels_last"))
    assert jnp.allclose(o_rl, _ref_channels_last(x_rl, w_r, b_r, eps),
                        atol=1e-5, rtol=1e-5)

    x_rf = jax.random.normal(k4, (3, C2, 7, 7), jnp.float32)   # s = 49 lanes
    o_rf = jax.block_until_ready(
        layer_norm(x_rf, w_r, b_r, eps=eps, data_format="channels_first"))
    assert jnp.allclose(o_rf, _ref_channels_first(x_rf, w_r, b_r, eps),
                        atol=1e-5, rtol=1e-5)

    print("KERNEL_OK")
</pallas_src>

<mosaic_0001>
module attributes {stable_mosaic.version = 11 : i64} {
  func.func @_ln_channels_last_kernel(%arg0: i32, %arg1: memref<256x128xf32, #tpu.memory_space<vmem>>, %arg2: memref<1x128xf32, #tpu.memory_space<vmem>>, %arg3: memref<1x128xf32, #tpu.memory_space<vmem>>, %arg4: memref<256x128xf32, #tpu.memory_space<vmem>>) attributes {dimension_semantics = [#tpu.dimension_semantics<parallel>], iteration_bounds = array<i64: 2>, scalar_prefetch = 0 : i64, scratch_operands = 0 : i64, tpu.core_type = #tpu.core_type<tc>, window_params = [{transform_indices = @transform_0, window_bounds = array<i64: 256, 128>}, {pipeline_mode = #tpu.pipeline_mode<synchronous>, transform_indices = @transform_1, window_bounds = array<i64: 1, 128>}, {pipeline_mode = #tpu.pipeline_mode<synchronous>, transform_indices = @transform_2, window_bounds = array<i64: 1, 128>}, {transform_indices = @transform_3, window_bounds = array<i64: 256, 128>}]} {
    %c0 = arith.constant 0 : index
    %c0_0 = arith.constant 0 : index
    %0 = vector.load %arg1[%c0, %c0_0] : memref<256x128xf32, #tpu.memory_space<vmem>>, vector<256x128xf32>
    %c0_1 = arith.constant 0 : index
    %c0_2 = arith.constant 0 : index
    %1 = vector.load %arg2[%c0_1, %c0_2] : memref<1x128xf32, #tpu.memory_space<vmem>>, vector<1x128xf32>
    %c0_3 = arith.constant 0 : index
    %c0_4 = arith.constant 0 : index
    %2 = vector.load %arg3[%c0_3, %c0_4] : memref<1x128xf32, #tpu.memory_space<vmem>>, vector<1x128xf32>
    %cst = arith.constant dense<0.000000e+00> : vector<256xf32>
    %3 = vector.multi_reduction <add>, %0, %cst [1] : vector<256x128xf32> to vector<256xf32>
    %4 = vector.shape_cast %3 : vector<256xf32> to vector<256x1xf32>
    %cst_5 = arith.constant 1.280000e+02 : f32
    %5 = vector.broadcast %cst_5 : f32 to vector<256x1xf32>
    %6 = arith.divf %4, %5 : vector<256x1xf32>
    %7 = vector.broadcast %6 : vector<256x1xf32> to vector<256x128xf32>
    %8 = arith.subf %0, %7 : vector<256x128xf32>
    %9 = arith.mulf %8, %8 : vector<256x128xf32>
    %cst_6 = arith.constant dense<0.000000e+00> : vector<256xf32>
    %10 = vector.multi_reduction <add>, %9, %cst_6 [1] : vector<256x128xf32> to vector<256xf32>
    %11 = vector.shape_cast %10 : vector<256xf32> to vector<256x1xf32>
    %cst_7 = arith.constant 1.280000e+02 : f32
    %12 = vector.broadcast %cst_7 : f32 to vector<256x1xf32>
    %13 = arith.divf %11, %12 : vector<256x1xf32>
    %cst_8 = arith.constant 9.99999997E-7 : f32
    %14 = vector.broadcast %cst_8 : f32 to vector<256x1xf32>
    %15 = arith.addf %13, %14 : vector<256x1xf32>
    %16 = math.rsqrt %15 : vector<256x1xf32>
    %17 = vector.broadcast %16 : vector<256x1xf32> to vector<256x128xf32>
    %18 = arith.mulf %8, %17 : vector<256x128xf32>
    %19 = vector.broadcast %1 : vector<1x128xf32> to vector<256x128xf32>
    %20 = arith.mulf %18, %19 : vector<256x128xf32>
    %21 = vector.broadcast %2 : vector<1x128xf32> to vector<256x128xf32>
    %22 = arith.addf %20, %21 : vector<256x128xf32>
    %c0_9 = arith.constant 0 : index
    %c0_10 = arith.constant 0 : index
    %23 = vector.load %arg4[%c0_9, %c0_10] : memref<256x128xf32, #tpu.memory_space<vmem>>, vector<256x128xf32>
    tpu.vector_store %arg4[%c0_9, %c0_10], %22 {strides = array<i32>} : memref<256x128xf32, #tpu.memory_space<vmem>>, vector<256x128xf32>,
    return
  }
  func.func @transform_0(%arg0: i32) -> (i32, i32) {
    %c0_i32 = arith.constant 0 : i32
    %c0_i32_0 = arith.constant 0 : i32
    return %arg0, %c0_i32 : i32, i32
  }
  func.func @transform_1(%arg0: i32) -> (i32, i32) {
    %c0_i32 = arith.constant 0 : i32
    %c0_i32_0 = arith.constant 0 : i32
    %c0_i32_1 = arith.constant 0 : i32
    return %c0_i32, %c0_i32_0 : i32, i32
  }
  func.func @transform_2(%arg0: i32) -> (i32, i32) {
    %c0_i32 = arith.constant 0 : i32
    %c0_i32_0 = arith.constant 0 : i32
    %c0_i32_1 = arith.constant 0 : i32
    return %c0_i32, %c0_i32_0 : i32, i32
  }
  func.func @transform_3(%arg0: i32) -> (i32, i32) {
    %c0_i32 = arith.constant 0 : i32
    %c0_i32_0 = arith.constant 0 : i32
    return %arg0, %c0_i32 : i32, i32
  }
}

</mosaic_0001>

<llo_original>
// kernel: tpu_custom_call.1
$region0: #{tpu_custom_call.1}
  #allocation0 [shape = 'u32[]', space=smem, size = 0x4, offset = 0x4, fixed_abs, tag = 'smem constant byte address 0x4 - core index']
  #allocation1 [shape = 'u32[144,128]{1,0:T(1,128)}', space=vmem, size = 0x12000, scoped, tag = 'internal scratch']
  %s0 = inlined_call_operand.hbm [shape: f32[512,128], index: 0, kind: input, shape index: {}]
  %s1 = inlined_call_operand.vmem [shape: f32[1,128], index: 1, kind: input, shape index: {}]
  %s2 = inlined_call_operand.vmem [shape: f32[1,128], index: 2, kind: input, shape index: {}]
  %s3 = inlined_call_operand.hbm [shape: f32[512,128], index: 3, kind: output, shape index: {}]
  %s4 = sld [smem:[#allocation0]]
  $region49: #{tpu_custom_call.1} parent=0
    _
  %s6 = ssub.s32 1, %s4
  %s7 = scalar_select 0, %s6, %s4
  $region1: #{tpu_custom_call.1} parent=0
    #allocation2 [shape = 'u8[262144]{0}', space=vmem, size = 0x40000, scoped, tag = 'input window, operand 0']
    #allocation3 [shape = 's32[2]{0}', space=sflag, size = 0x8, scoped, tag = 'scoped memory for tpu_custom_call.1']
    #allocation4 [shape = 's32[2]{0}', space=sflag, size = 0x8, scoped, tag = 'scoped memory for tpu_custom_call.1']
    #allocation5 [shape = 'u8[262144]{0}', space=vmem, size = 0x40000, scoped, tag = 'output window, operand 0']
    %8 = vsyncpa [#allocation3], 0
    %s9 = scalar_lea.sflag [#allocation3], 1
    %10 = vsyncpa %s9, 0
    %11 = vsyncpa [#allocation4], 0
    %s12 = scalar_lea.sflag [#allocation4], 1
    %13 = vsyncpa %s12, 0
    loop: start=0, step=1, limit=4
    $region2: #{tpu_custom_call.1} parent=1 // loop_pre_header
      _
    $region3: #{tpu_custom_call.1} parent=1 // loop_header
      %s15 = sphi 0, %s19
      %p16 = scmp.ge.s32.totalorder %s15, 4
      %s25 = sphi 0, %s27
      %s28 = sphi 0, %s25
      %s29 = sphi 0, %s28
      %s45 = sphi 0, %s29
      %s49 = sphi 0, %s49
      %s51 = sphi 0, %s49
      %s52 = sphi 0, %s51
      %s66 = sphi 0, %s52
      %s70 = sphi 0, %s70
      %s72 = sphi 0, %s70
      %s73 = sphi 0, %s72
      %s87 = sphi 0, %s73
      %s93 = sphi 0, %s95
      %s96 = sphi 0, %s93
      %s97 = sphi 0, %s96
      %s113 = sphi 0, %s97
    $region4: #{tpu_custom_call.1} parent=1 // loop_header_branch
      %18 = sbr.rel (%p16) target = $region8
    $region5: #{tpu_custom_call.1} parent=1 // loop_body
      %s20 = ssub.s32 %s15, 1
      %s21 = ssub.s32 %s15, 2
      %s22 = sadd.s32 %s15, 1
      %s23 = ssub.s32 %s15, %s22
      %p24 = scmp.eq.s32.totalorder %s23, 0
      %s26 = sadd.s32 %s25, 1
      %s27 = scalar_select %p24, %s25, %s26
      %p30 = pneg %p24
      %p31 = scmp.eq.s32.totalorder %s15, 1
      %p32 = por %p30, %p31
      %p33 = scmp.ne.s32.totalorder %s25, %s28
      %p34 = scmp.eq.s32.totalorder %s15, 0
      %p35 = por %p33, %p34
      %p36 = scmp.ne.s32.totalorder %s25, %s28
      %p37 = scmp.eq.s32.totalorder %s20, 1
      %p38 = por %p36, %p37
      %p39 = scmp.ne.s32.totalorder %s28, %s29
      %p40 = scmp.eq.s32.totalorder %s20, 0
      %p41 = por %p39, %p40
      %p42 = scmp.ne.s32.totalorder %s28, %s29
      %p43 = scmp.eq.s32.totalorder %s21, 1
      %p44 = por %p42, %p43
      %p46 = scmp.ne.s32.totalorder %s29, %s45
      %p47 = scmp.eq.s32.totalorder %s21, 0
      %p48 = por %p46, %p47
      %s50 = sadd.s32 %s49, 1
      %p53 = scmp.eq.s32.totalorder %s15, 1
      %p54 = scmp.ne.s32.totalorder %s49, %s51
      %p55 = scmp.eq.s32.totalorder %s15, 0
      %p56 = por %p54, %p55
      %p57 = scmp.ne.s32.totalorder %s49, %s51
      %p58 = scmp.eq.s32.totalorder %s20, 1
      %p59 = por %p57, %p58
      %p60 = scmp.ne.s32.totalorder %s51, %s52
      %p61 = scmp.eq.s32.totalorder %s20, 0
      %p62 = por %p60, %p61
      %p63 = scmp.ne.s32.totalorder %s51, %s52
      %p64 = scmp.eq.s32.totalorder %s21, 1
      %p65 = por %p63, %p64
      %p67 = scmp.ne.s32.totalorder %s52, %s66
      %p68 = scmp.eq.s32.totalorder %s21, 0
      %p69 = por %p67, %p68
      %s71 = sadd.s32 %s70, 1
      %p74 = scmp.eq.s32.totalorder %s15, 1
      %p75 = scmp.ne.s32.totalorder %s70, %s72
      %p76 = scmp.eq.s32.totalorder %s15, 0
      %p77 = por %p75, %p76
      %p78 = scmp.ne.s32.totalorder %s70, %s72
      %p79 = scmp.eq.s32.totalorder %s20, 1
      %p80 = por %p78, %p79
      %p81 = scmp.ne.s32.totalorder %s72, %s73
      %p82 = scmp.eq.s32.totalorder %s20, 0
      %p83 = por %p81, %p82
      %p84 = scmp.ne.s32.totalorder %s72, %s73
      %p85 = scmp.eq.s32.totalorder %s21, 1
      %p86 = por %p84, %p85
      %p88 = scmp.ne.s32.totalorder %s73, %s87
      %p89 = scmp.eq.s32.totalorder %s21, 0
      %p90 = por %p88, %p89
      %s91 = ssub.s32 %s15, %s22
      %p92 = scmp.eq.s32.totalorder %s91, 0
      %s94 = sadd.s32 %s93, 1
      %s95 = scalar_select %p92, %s93, %s94
      %p98 = pneg %p92
      %p99 = scmp.eq.s32.totalorder %s15, 1
      %p100 = por %p98, %p99
      %p101 = scmp.ne.s32.totalorder %s93, %s96
      %p102 = scmp.eq.s32.totalorder %s15, 0
      %p103 = por %p101, %p102
      %p104 = scmp.ne.s32.totalorder %s93, %s96
      %p105 = scmp.eq.s32.totalorder %s20, 1
      %p106 = por %p104, %p105
      %p107 = scmp.ne.s32.totalorder %s96, %s97
      %p108 = scmp.eq.s32.totalorder %s20, 0
      %p109 = por %p107, %p108
      %p110 = scmp.ne.s32.totalorder %s96, %s97
      %p111 = scmp.eq.s32.totalorder %s21, 1
      %p112 = por %p110, %p111
      %p114 = scmp.ne.s32.totalorder %s97, %s113
      %p115 = scmp.eq.s32.totalorder %s21, 0
      %p116 = por %p114, %p115
      %p117 = scmp.le.s32.totalorder 1, %s15
      %p118 = scmp.lt.s32.totalorder %s15, 3
      %p119 = pnand %p117, %p118
      %p120 = pneg %p119
      // Predicated region
      $region9: #{tpu_custom_call.1} parent=5 // pred_check
        _
      $region10: #{tpu_custom_call.1} parent=5 // pred_check_branch
        %122 = sbr.rel (%p119) target = $region12
      $region11: #{tpu_custom_call.1} parent=5 // pred_region
        %s123 = ssub.s32 %s15, 1
        // Predicated region
        $region13: #{tpu_custom_call.1} parent=11 // pred_check
          %p124 = pneg %p62
        $region14: #{tpu_custom_call.1} parent=11 // pred_check_branch
          %126 = sbr.rel (%p124) target = $region16
        $region15: #{tpu_custom_call.1} parent=11 // pred_region
          _
        $region16: #{tpu_custom_call.1} parent=11 // pred_fallthru
          _
        // Predicated region
        $region17: #{tpu_custom_call.1} parent=11 // pred_check
          %p127 = pneg %p83
        $region18: #{tpu_custom_call.1} parent=11 // pred_check_branch
          %129 = sbr.rel (%p127) target = $region20
        $region19: #{tpu_custom_call.1} parent=11 // pred_region
          _
        $region20: #{tpu_custom_call.1} parent=11 // pred_fallthru
          _
      $region12: #{tpu_custom_call.1} parent=5 // pred_fallthru
        _
      %p130 = scmp.lt.s32.totalorder %s15, 2
      // Predicated region
      $region21: #{tpu_custom_call.1} parent=5 // pred_check
        %p131 = pneg %p130
      $region22: #{tpu_custom_call.1} parent=5 // pred_check_branch
        %133 = sbr.rel (%p131) target = $region24
      $region23: #{tpu_custom_call.1} parent=5 // pred_region
        // Predicated region
        $region25: #{tpu_custom_call.1} parent=23 // pred_check
          %p134 = pneg %p35
        $region26: #{tpu_custom_call.1} parent=23 // pred_check_branch
          %136 = sbr.rel (%p134) target = $region28
        $region27: #{tpu_custom_call.1} parent=23 // pred_region
          %s137 = sand.u32 %s25, 1
          %s138 = scalar_lea.sflag [#allocation3], %s137
          %s139 = sand.u32 %s25, 1
          %s140 = smul.addr %s139, 256
          %s141 = scalar_lea.vmem [#allocation2], %s140
          %s142 = smul.u32 32, %s15
          %s144 = ssub.s32 4096, 4096
          %145 = vsyncadd %s138, %s144
          %s146 = smul.addr %s142, 128
          %s147 = scalar_lea.hbm %s0, %s146
          %s148 = sshll.u32 %s141, 4
          %s149 = int_to_ptr.vmem [resolvable:$true] %s148
          %154 = dma.hbm_to_vmem [thread:$0]  %s147, 4096, %s149, %s138, 128, 128, 8
        $region28: #{tpu_custom_call.1} parent=23 // pred_fallthru
          _
      $region24: #{tpu_custom_call.1} parent=5 // pred_fallthru
        _
      %p155 = scmp.le.s32.totalorder 1, %s15
      %p156 = scmp.lt.s32.totalorder %s15, 3
      %p157 = pnand %p155, %p156
      %p158 = pneg %p157
      // Predicated region
      $region29: #{tpu_custom_call.1} parent=5 // pred_check
        _
      $region30: #{tpu_custom_call.1} parent=5 // pred_check_branch
        %160 = sbr.rel (%p157) target = $region32
      $region31: #{tpu_custom_call.1} parent=5 // pred_region
        %s161 = ssub.s32 %s15, 1
        %s162 = sand.u32 %s28, 1
        %s163 = scalar_lea.sflag [#allocation3], %s162
        %s164 = sand.u32 %s28, 1
        %s165 = smul.addr %s164, 256
        %s166 = scalar_lea.vmem [#allocation2], %s165
        // Predicated region
        $region33: #{tpu_custom_call.1} parent=31 // pred_check
          %p167 = pneg %p41
        $region34: #{tpu_custom_call.1} parent=31 // pred_check_branch
          %169 = sbr.rel (%p167) target = $region36
        $region35: #{tpu_custom_call.1} parent=31 // pred_region
          %170 = dma.done %s163, 4096
        $region36: #{tpu_custom_call.1} parent=31 // pred_fallthru
          _
        %s171 = sand.u32 %s28, 1
        %s172 = scalar_lea.sflag [#allocation3], %s171
        %s173 = sand.u32 %s28, 1
        %s174 = smul.addr %s173, 256
        %s175 = scalar_lea.vmem [#allocation2], %s174
        %p176 = pneg %p41
        %p177 = pneg %p38
        %p178 = pneg %p62
        %p179 = pneg %p59
        %p180 = pneg %p83
        %p181 = pneg %p80
        %p182 = pneg %p109
        %p183 = pneg %p106
        %s184 = sand.u32 %s96, 1
        %s185 = scalar_lea.sflag [#allocation4], %s184
        %s186 = sand.u32 %s96, 1
        %s187 = smul.addr %s186, 256
        %s188 = scalar_lea.vmem [#allocation5], %s187
        %s189 = smul.u32 32, %s20
        %s190 = smul.u32 32, %s20
        %v191 = vld [vmem:[%s166] sm:$0xff]
        %v192 = vld [vmem:[%s166 + $0x8] sm:$0xff]
        %v193 = vld [vmem:[%s166 + $0x10] sm:$0xff]
        %v194 = vld [vmem:[%s166 + $0x18] sm:$0xff]
        %v195 = vld [vmem:[%s166 + $0x20] sm:$0xff]
        %v196 = vld [vmem:[%s166 + $0x28] sm:$0xff]
        %v197 = vld [vmem:[%s166 + $0x30] sm:$0xff]
        %v198 = vld [vmem:[%s166 + $0x38] sm:$0xff]
        %v199 = vld [vmem:[%s166 + $0x40] sm:$0xff]
        %v200 = vld [vmem:[%s166 + $0x48] sm:$0xff]
        %v201 = vld [vmem:[%s166 + $0x50] sm:$0xff]
        %v202 = vld [vmem:[%s166 + $0x58] sm:$0xff]
        %v203 = vld [vmem:[%s166 + $0x60] sm:$0xff]
        %v204 = vld [vmem:[%s166 + $0x68] sm:$0xff]
        %v205 = vld [vmem:[%s166 + $0x70] sm:$0xff]
        %v206 = vld [vmem:[%s166 + $0x78] sm:$0xff]
        %v207 = vld [vmem:[%s166 + $0x80] sm:$0xff]
        %v208 = vld [vmem:[%s166 + $0x88] sm:$0xff]
        %v209 = vld [vmem:[%s166 + $0x90] sm:$0xff]
        %v210 = vld [vmem:[%s166 + $0x98] sm:$0xff]
        %v211 = vld [vmem:[%s166 + $0xa0] sm:$0xff]
        %v212 = vld [vmem:[%s166 + $0xa8] sm:$0xff]
        %v213 = vld [vmem:[%s166 + $0xb0] sm:$0xff]
        %v214 = vld [vmem:[%s166 + $0xb8] sm:$0xff]
        %v215 = vld [vmem:[%s166 + $0xc0] sm:$0xff]
        %v216 = vld [vmem:[%s166 + $0xc8] sm:$0xff]
        %v217 = vld [vmem:[%s166 + $0xd0] sm:$0xff]
        %v218 = vld [vmem:[%s166 + $0xd8] sm:$0xff]
        %v219 = vld [vmem:[%s166 + $0xe0] sm:$0xff]
        %v220 = vld [vmem:[%s166 + $0xe8] sm:$0xff]
        %v221 = vld [vmem:[%s166 + $0xf0] sm:$0xff]
        %v222 = vld [vmem:[%s166 + $0xf8] sm:$0xff]
        %v223 = vld [vmem:[%s1] sm:$0x1]
        %v224 = vld [vmem:[%s2] sm:$0x1]
        %225 = vadd.xlane.f32.xlu0 %v191
        %v226 = vpop.xlane.xlu0 %225
        %227 = vadd.xlane.f32.xlu0 %v192
        %v228 = vpop.xlane.xlu0 %227
        %229 = vadd.xlane.f32.xlu0 %v193
        %v230 = vpop.xlane.xlu0 %229
        %231 = vadd.xlane.f32.xlu0 %v194
        %v232 = vpop.xlane.xlu0 %231
        %233 = vadd.xlane.f32.xlu0 %v195
        %v234 = vpop.xlane.xlu0 %233
        %235 = vadd.xlane.f32.xlu0 %v196
        %v236 = vpop.xlane.xlu0 %235
        %237 = vadd.xlane.f32.xlu0 %v197
        %v238 = vpop.xlane.xlu0 %237
        %239 = vadd.xlane.f32.xlu0 %v198
        %v240 = vpop.xlane.xlu0 %239
        %241 = vadd.xlane.f32.xlu0 %v199
        %v242 = vpop.xlane.xlu0 %241
        %243 = vadd.xlane.f32.xlu0 %v200
        %v244 = vpop.xlane.xlu0 %243
        %245 = vadd.xlane.f32.xlu0 %v201
        %v246 = vpop.xlane.xlu0 %245
        %247 = vadd.xlane.f32.xlu0 %v202
        %v248 = vpop.xlane.xlu0 %247
        %249 = vadd.xlane.f32.xlu0 %v203
        %v250 = vpop.xlane.xlu0 %249
        %251 = vadd.xlane.f32.xlu0 %v204
        %v252 = vpop.xlane.xlu0 %251
        %253 = vadd.xlane.f32.xlu0 %v205
        %v254 = vpop.xlane.xlu0 %253
        %255 = vadd.xlane.f32.xlu0 %v206
        %v256 = vpop.xlane.xlu0 %255
        %257 = vadd.xlane.f32.xlu0 %v207
        %v258 = vpop.xlane.xlu0 %257
        %259 = vadd.xlane.f32.xlu0 %v208
        %v260 = vpop.xlane.xlu0 %259
        %261 = vadd.xlane.f32.xlu0 %v209
        %v262 = vpop.xlane.xlu0 %261
        %263 = vadd.xlane.f32.xlu0 %v210
        %v264 = vpop.xlane.xlu0 %263
        %265 = vadd.xlane.f32.xlu0 %v211
        %v266 = vpop.xlane.xlu0 %265
        %267 = vadd.xlane.f32.xlu0 %v212
        %v268 = vpop.xlane.xlu0 %267
        %269 = vadd.xlane.f32.xlu0 %v213
        %v270 = vpop.xlane.xlu0 %269
        %271 = vadd.xlane.f32.xlu0 %v214
        %v272 = vpop.xlane.xlu0 %271
        %273 = vadd.xlane.f32.xlu0 %v215
        %v274 = vpop.xlane.xlu0 %273
        %275 = vadd.xlane.f32.xlu0 %v216
        %v276 = vpop.xlane.xlu0 %275
        %277 = vadd.xlane.f32.xlu0 %v217
        %v278 = vpop.xlane.xlu0 %277
        %279 = vadd.xlane.f32.xlu0 %v218
        %v280 = vpop.xlane.xlu0 %279
        %281 = vadd.xlane.f32.xlu0 %v219
        %v282 = vpop.xlane.xlu0 %281
        %283 = vadd.xlane.f32.xlu0 %v220
        %v284 = vpop.xlane.xlu0 %283
        %285 = vadd.xlane.f32.xlu0 %v221
        %v286 = vpop.xlane.xlu0 %285
        %287 = vadd.xlane.f32.xlu0 %v222
        %v288 = vpop.xlane.xlu0 %287
        %v289 = vrcp.pop 128.0
        %v290 = vmul.f32 %v226, %v289
        %v291 = vmul.f32 %v228, %v289
        %v292 = vmul.f32 %v230, %v289
        %v293 = vmul.f32 %v232, %v289
        %v294 = vmul.f32 %v234, %v289
        %v295 = vmul.f32 %v236, %v289
        %v296 = vmul.f32 %v238, %v289
        %v297 = vmul.f32 %v240, %v289
        %v298 = vmul.f32 %v242, %v289
        %v299 = vmul.f32 %v244, %v289
        %v300 = vmul.f32 %v246, %v289
        %v301 = vmul.f32 %v248, %v289
        %v302 = vmul.f32 %v250, %v289
        %v303 = vmul.f32 %v252, %v289
        %v304 = vmul.f32 %v254, %v289
        %v305 = vmul.f32 %v256, %v289
        %v306 = vmul.f32 %v258, %v289
        %v307 = vmul.f32 %v260, %v289
        %v308 = vmul.f32 %v262, %v289
        %v309 = vmul.f32 %v264, %v289
        %v310 = vmul.f32 %v266, %v289
        %v311 = vmul.f32 %v268, %v289
        %v312 = vmul.f32 %v270, %v289
        %v313 = vmul.f32 %v272, %v289
        %v314 = vmul.f32 %v274, %v289
        %v315 = vmul.f32 %v276, %v289
        %v316 = vmul.f32 %v278, %v289
        %v317 = vmul.f32 %v280, %v289
        %v318 = vmul.f32 %v282, %v289
        %v319 = vmul.f32 %v284, %v289
        %v320 = vmul.f32 %v286, %v289
        %v321 = vmul.f32 %v288, %v289
        %v322 = vsub.f32 %v191, %v290
        %v323 = vsub.f32 %v192, %v291
        %v324 = vsub.f32 %v193, %v292
        %v325 = vsub.f32 %v194, %v293
        %v326 = vsub.f32 %v195, %v294
        %v327 = vsub.f32 %v196, %v295
        %v328 = vsub.f32 %v197, %v296
        %v329 = vsub.f32 %v198, %v297
        %v330 = vsub.f32 %v199, %v298
        %v331 = vsub.f32 %v200, %v299
        %v332 = vsub.f32 %v201, %v300
        %v333 = vsub.f32 %v202, %v301
        %v334 = vsub.f32 %v203, %v302
        %v335 = vsub.f32 %v204, %v303
        %v336 = vsub.f32 %v205, %v304
        %v337 = vsub.f32 %v206, %v305
        %v338 = vsub.f32 %v207, %v306
        %v339 = vsub.f32 %v208, %v307
        %v340 = vsub.f32 %v209, %v308
        %v341 = vsub.f32 %v210, %v309
        %v342 = vsub.f32 %v211, %v310
        %v343 = vsub.f32 %v212, %v311
        %v344 = vsub.f32 %v213, %v312
        %v345 = vsub.f32 %v214, %v313
        %v346 = vsub.f32 %v215, %v314
        %v347 = vsub.f32 %v216, %v315
        %v348 = vsub.f32 %v217, %v316
        %v349 = vsub.f32 %v218, %v317
        %v350 = vsub.f32 %v219, %v318
        %v351 = vsub.f32 %v220, %v319
        %v352 = vsub.f32 %v221, %v320
        %v353 = vsub.f32 %v222, %v321
        %v354 = vmul.f32 %v322, %v322
        %v355 = vmul.f32 %v323, %v323
        %v356 = vmul.f32 %v324, %v324
        %v357 = vmul.f32 %v325, %v325
        %v358 = vmul.f32 %v326, %v326
        %v359 = vmul.f32 %v327, %v327
        %v360 = vmul.f32 %v328, %v328
        %v361 = vmul.f32 %v329, %v329
        %v362 = vmul.f32 %v330, %v330
        %v363 = vmul.f32 %v331, %v331
        %v364 = vmul.f32 %v332, %v332
        %v365 = vmul.f32 %v333, %v333
        %v366 = vmul.f32 %v334, %v334
        %v367 = vmul.f32 %v335, %v335
        %v368 = vmul.f32 %v336, %v336
        %v369 = vmul.f32 %v337, %v337
        %v370 = vmul.f32 %v338, %v338
        %v371 = vmul.f32 %v339, %v339
        %v372 = vmul.f32 %v340, %v340
        %v373 = vmul.f32 %v341, %v341
        %v374 = vmul.f32 %v342, %v342
        %v375 = vmul.f32 %v343, %v343
        %v376 = vmul.f32 %v344, %v344
        %v377 = vmul.f32 %v345, %v345
        %v378 = vmul.f32 %v346, %v346
        %v379 = vmul.f32 %v347, %v347
        %v380 = vmul.f32 %v348, %v348
        %v381 = vmul.f32 %v349, %v349
        %v382 = vmul.f32 %v350, %v350
        %v383 = vmul.f32 %v351, %v351
        %v384 = vmul.f32 %v352, %v352
        %v385 = vmul.f32 %v353, %v353
        %386 = vadd.xlane.f32.xlu0 %v354
        %v387 = vpop.xlane.xlu0 %386
        %388 = vadd.xlane.f32.xlu0 %v355
        %v389 = vpop.xlane.xlu0 %388
        %390 = vadd.xlane.f32.xlu0 %v356
        %v391 = vpop.xlane.xlu0 %390
        %392 = vadd.xlane.f32.xlu0 %v357
        %v393 = vpop.xlane.xlu0 %392
        %394 = vadd.xlane.f32.xlu0 %v358
        %v395 = vpop.xlane.xlu0 %394
        %396 = vadd.xlane.f32.xlu0 %v359
        %v397 = vpop.xlane.xlu0 %396
        %398 = vadd.xlane.f32.xlu0 %v360
        %v399 = vpop.xlane.xlu0 %398
        %400 = vadd.xlane.f32.xlu0 %v361
        %v401 = vpop.xlane.xlu0 %400
        %402 = vadd.xlane.f32.xlu0 %v362
        %v403 = vpop.xlane.xlu0 %402
        %404 = vadd.xlane.f32.xlu0 %v363
        %v405 = vpop.xlane.xlu0 %404
        %406 = vadd.xlane.f32.xlu0 %v364
        %v407 = vpop.xlane.xlu0 %406
        %408 = vadd.xlane.f32.xlu0 %v365
        %v409 = vpop.xlane.xlu0 %408
        %410 = vadd.xlane.f32.xlu0 %v366
        %v411 = vpop.xlane.xlu0 %410
        %412 = vadd.xlane.f32.xlu0 %v367
        %v413 = vpop.xlane.xlu0 %412
        %414 = vadd.xlane.f32.xlu0 %v368
        %v415 = vpop.xlane.xlu0 %414
        %416 = vadd.xlane.f32.xlu0 %v369
        %v417 = vpop.xlane.xlu0 %416
        %418 = vadd.xlane.f32.xlu0 %v370
        %v419 = vpop.xlane.xlu0 %418
        %420 = vadd.xlane.f32.xlu0 %v371
        %v421 = vpop.xlane.xlu0 %420
        %422 = vadd.xlane.f32.xlu0 %v372
        %v423 = vpop.xlane.xlu0 %422
        %424 = vadd.xlane.f32.xlu0 %v373
        %v425 = vpop.xlane.xlu0 %424
        %426 = vadd.xlane.f32.xlu0 %v374
        %v427 = vpop.xlane.xlu0 %426
        %428 = vadd.xlane.f32.xlu0 %v375
        %v429 = vpop.xlane.xlu0 %428
        %430 = vadd.xlane.f32.xlu0 %v376
        %v431 = vpop.xlane.xlu0 %430
        %432 = vadd.xlane.f32.xlu0 %v377
        %v433 = vpop.xlane.xlu0 %432
        %434 = vadd.xlane.f32.xlu0 %v378
        %v435 = vpop.xlane.xlu0 %434
        %436 = vadd.xlane.f32.xlu0 %v379
        %v437 = vpop.xlane.xlu0 %436
        %438 = vadd.xlane.f32.xlu0 %v380
        %v439 = vpop.xlane.xlu0 %438
        %440 = vadd.xlane.f32.xlu0 %v381
        %v441 = vpop.xlane.xlu0 %440
        %442 = vadd.xlane.f32.xlu0 %v382
        %v443 = vpop.xlane.xlu0 %442
        %444 = vadd.xlane.f32.xlu0 %v383
        %v445 = vpop.xlane.xlu0 %444
        %446 = vadd.xlane.f32.xlu0 %v384
        %v447 = vpop.xlane.xlu0 %446
        %448 = vadd.xlane.f32.xlu0 %v385
        %v449 = vpop.xlane.xlu0 %448
        %v450 = vmul.f32 %v387, %v289
        %v451 = vmul.f32 %v389, %v289
        %v452 = vmul.f32 %v391, %v289
        %v453 = vmul.f32 %v393, %v289
        %v454 = vmul.f32 %v395, %v289
        %v455 = vmul.f32 %v397, %v289
        %v456 = vmul.f32 %v399, %v289
        %v457 = vmul.f32 %v401, %v289
        %v458 = vmul.f32 %v403, %v289
        %v459 = vmul.f32 %v405, %v289
        %v460 = vmul.f32 %v407, %v289
        %v461 = vmul.f32 %v409, %v289
        %v462 = vmul.f32 %v411, %v289
        %v463 = vmul.f32 %v413, %v289
        %v464 = vmul.f32 %v415, %v289
        %v465 = vmul.f32 %v417, %v289
        %v466 = vmul.f32 %v419, %v289
        %v467 = vmul.f32 %v421, %v289
        %v468 = vmul.f32 %v423, %v289
        %v469 = vmul.f32 %v425, %v289
        %v470 = vmul.f32 %v427, %v289
        %v471 = vmul.f32 %v429, %v289
        %v472 = vmul.f32 %v431, %v289
        %v473 = vmul.f32 %v433, %v289
        %v474 = vmul.f32 %v435, %v289
        %v475 = vmul.f32 %v437, %v289
        %v476 = vmul.f32 %v439, %v289
        %v477 = vmul.f32 %v441, %v289
        %v478 = vmul.f32 %v443, %v289
        %v479 = vmul.f32 %v445, %v289
        %v480 = vmul.f32 %v447, %v289
        %v481 = vmul.f32 %v449, %v289
        %v482 = vadd.f32 %v450, 1e-06
        %v483 = vadd.f32 %v451, 1e-06
        %v484 = vadd.f32 %v452, 1e-06
        %v485 = vadd.f32 %v453, 1e-06
        %v486 = vadd.f32 %v454, 1e-06
        %v487 = vadd.f32 %v455, 1e-06
        %v488 = vadd.f32 %v456, 1e-06
        %v489 = vadd.f32 %v457, 1e-06
        %v490 = vadd.f32 %v458, 1e-06
        %v491 = vadd.f32 %v459, 1e-06
        %v492 = vadd.f32 %v460, 1e-06
        %v493 = vadd.f32 %v461, 1e-06
        %v494 = vadd.f32 %v462, 1e-06
        %v495 = vadd.f32 %v463, 1e-06
        %v496 = vadd.f32 %v464, 1e-06
        %v497 = vadd.f32 %v465, 1e-06
        %v498 = vadd.f32 %v466, 1e-06
        %v499 = vadd.f32 %v467, 1e-06
        %v500 = vadd.f32 %v468, 1e-06
        %v501 = vadd.f32 %v469, 1e-06
        %v502 = vadd.f32 %v470, 1e-06
        %v503 = vadd.f32 %v471, 1e-06
        %v504 = vadd.f32 %v472, 1e-06
        %v505 = vadd.f32 %v473, 1e-06
        %v506 = vadd.f32 %v474, 1e-06
        %v507 = vadd.f32 %v475, 1e-06
        %v508 = vadd.f32 %v476, 1e-06
        %v509 = vadd.f32 %v477, 1e-06
        %v510 = vadd.f32 %v478, 1e-06
        %v511 = vadd.f32 %v479, 1e-06
        %v512 = vadd.f32 %v480, 1e-06
        %v513 = vadd.f32 %v481, 1e-06
        %v514 = vrsqrt.pop %v482
        %v515 = vrsqrt.pop %v483
        %v516 = vrsqrt.pop %v484
        %v517 = vrsqrt.pop %v485
        %v518 = vrsqrt.pop %v486
        %v519 = vrsqrt.pop %v487
        %v520 = vrsqrt.pop %v488
        %v521 = vrsqrt.pop %v489
        %v522 = vrsqrt.pop %v490
        %v523 = vrsqrt.pop %v491
        %v524 = vrsqrt.pop %v492
        %v525 = vrsqrt.pop %v493
        %v526 = vrsqrt.pop %v494
        %v527 = vrsqrt.pop %v495
        %v528 = vrsqrt.pop %v496
        %v529 = vrsqrt.pop %v497
        %v530 = vrsqrt.pop %v498
        %v531 = vrsqrt.pop %v499
        %v532 = vrsqrt.pop %v500
        %v533 = vrsqrt.pop %v501
        %v534 = vrsqrt.pop %v502
        %v535 = vrsqrt.pop %v503
        %v536 = vrsqrt.pop %v504
        %v537 = vrsqrt.pop %v505
        %v538 = vrsqrt.pop %v506
        %v539 = vrsqrt.pop %v507
        %v540 = vrsqrt.pop %v508
        %v541 = vrsqrt.pop %v509
        %v542 = vrsqrt.pop %v510
        %v543 = vrsqrt.pop %v511
        %v544 = vrsqrt.pop %v512
        %v545 = vrsqrt.pop %v513
        %v546 = vmul.f32 %v322, %v514
        %v547 = vmul.f32 %v323, %v515
        %v548 = vmul.f32 %v324, %v516
        %v549 = vmul.f32 %v325, %v517
        %v550 = vmul.f32 %v326, %v518
        %v551 = vmul.f32 %v327, %v519
        %v552 = vmul.f32 %v328, %v520
        %v553 = vmul.f32 %v329, %v521
        %v554 = vmul.f32 %v330, %v522
        %v555 = vmul.f32 %v331, %v523
        %v556 = vmul.f32 %v332, %v524
        %v557 = vmul.f32 %v333, %v525
        %v558 = vmul.f32 %v334, %v526
        %v559 = vmul.f32 %v335, %v527
        %v560 = vmul.f32 %v336, %v528
        %v561 = vmul.f32 %v337, %v529
        %v562 = vmul.f32 %v338, %v530
        %v563 = vmul.f32 %v339, %v531
        %v564 = vmul.f32 %v340, %v532
        %v565 = vmul.f32 %v341, %v533
        %v566 = vmul.f32 %v342, %v534
        %v567 = vmul.f32 %v343, %v535
        %v568 = vmul.f32 %v344, %v536
        %v569 = vmul.f32 %v345, %v537
        %v570 = vmul.f32 %v346, %v538
        %v571 = vmul.f32 %v347, %v539
        %v572 = vmul.f32 %v348, %v540
        %v573 = vmul.f32 %v349, %v541
        %v574 = vmul.f32 %v350, %v542
        %v575 = vmul.f32 %v351, %v543
        %v576 = vmul.f32 %v352, %v544
        %v577 = vmul.f32 %v353, %v545
        %v579 = vlaneseq
        %v580 = vshrl.u32 %v579, 7
        %v581 = vsub.s32 0, %v580
        %v582 = vrot.slane %v223, %v581
        %v584 = vmul.f32 %v546, %v582
        %v585 = vmul.f32 %v547, %v582
        %v586 = vmul.f32 %v548, %v582
        %v587 = vmul.f32 %v549, %v582
        %v588 = vmul.f32 %v550, %v582
        %v589 = vmul.f32 %v551, %v582
        %v590 = vmul.f32 %v552, %v582
        %v591 = vmul.f32 %v553, %v582
        %v592 = vmul.f32 %v554, %v582
        %v593 = vmul.f32 %v555, %v582
        %v594 = vmul.f32 %v556, %v582
        %v595 = vmul.f32 %v557, %v582
        %v596 = vmul.f32 %v558, %v582
        %v597 = vmul.f32 %v559, %v582
        %v598 = vmul.f32 %v560, %v582
        %v599 = vmul.f32 %v561, %v582
        %v600 = vmul.f32 %v562, %v582
        %v601 = vmul.f32 %v563, %v582
        %v602 = vmul.f32 %v564, %v582
        %v603 = vmul.f32 %v565, %v582
        %v604 = vmul.f32 %v566, %v582
        %v605 = vmul.f32 %v567, %v582
        %v606 = vmul.f32 %v568, %v582
        %v607 = vmul.f32 %v569, %v582
        %v608 = vmul.f32 %v570, %v582
        %v609 = vmul.f32 %v571, %v582
        %v610 = vmul.f32 %v572, %v582
        %v611 = vmul.f32 %v573, %v582
        %v612 = vmul.f32 %v574, %v582
        %v613 = vmul.f32 %v575, %v582
        %v614 = vmul.f32 %v576, %v582
        %v615 = vmul.f32 %v577, %v582
        %v617 = vlaneseq
        %v618 = vshrl.u32 %v617, 7
        %v619 = vsub.s32 0, %v618
        %v620 = vrot.slane %v224, %v619
        %v622 = vadd.f32 %v584, %v620
        %v623 = vadd.f32 %v585, %v620
        %v624 = vadd.f32 %v586, %v620
        %v625 = vadd.f32 %v587, %v620
        %v626 = vadd.f32 %v588, %v620
        %v627 = vadd.f32 %v589, %v620
        %v628 = vadd.f32 %v590, %v620
        %v629 = vadd.f32 %v591, %v620
        %v630 = vadd.f32 %v592, %v620
        %v631 = vadd.f32 %v593, %v620
        %v632 = vadd.f32 %v594, %v620
        %v633 = vadd.f32 %v595, %v620
        %v634 = vadd.f32 %v596, %v620
        %v635 = vadd.f32 %v597, %v620
        %v636 = vadd.f32 %v598, %v620
        %v637 = vadd.f32 %v599, %v620
        %v638 = vadd.f32 %v600, %v620
        %v639 = vadd.f32 %v601, %v620
        %v640 = vadd.f32 %v602, %v620
        %v641 = vadd.f32 %v603, %v620
        %v642 = vadd.f32 %v604, %v620
        %v643 = vadd.f32 %v605, %v620
        %v644 = vadd.f32 %v606, %v620
        %v645 = vadd.f32 %v607, %v620
        %v646 = vadd.f32 %v608, %v620
        %v647 = vadd.f32 %v609, %v620
        %v648 = vadd.f32 %v610, %v620
        %v649 = vadd.f32 %v611, %v620
        %v650 = vadd.f32 %v612, %v620
        %v651 = vadd.f32 %v613, %v620
        %v652 = vadd.f32 %v614, %v620
        %v653 = vadd.f32 %v615, %v620
        %654 = vst [vmem:[%s188] sm:$0xff] %v622
        %655 = vst [vmem:[%s188 + $0x8] sm:$0xff] %v623
        %656 = vst [vmem:[%s188 + $0x10] sm:$0xff] %v624
        %657 = vst [vmem:[%s188 + $0x18] sm:$0xff] %v625
        %658 = vst [vmem:[%s188 + $0x20] sm:$0xff] %v626
        %659 = vst [vmem:[%s188 + $0x28] sm:$0xff] %v627
        %660 = vst [vmem:[%s188 + $0x30] sm:$0xff] %v628
        %661 = vst [vmem:[%s188 + $0x38] sm:$0xff] %v629
        %662 = vst [vmem:[%s188 + $0x40] sm:$0xff] %v630
        %663 = vst [vmem:[%s188 + $0x48] sm:$0xff] %v631
        %664 = vst [vmem:[%s188 + $0x50] sm:$0xff] %v632
        %665 = vst [vmem:[%s188 + $0x58] sm:$0xff] %v633
        %666 = vst [vmem:[%s188 + $0x60] sm:$0xff] %v634
        %667 = vst [vmem:[%s188 + $0x68] sm:$0xff] %v635
        %668 = vst [vmem:[%s188 + $0x70] sm:$0xff] %v636
        %669 = vst [vmem:[%s188 + $0x78] sm:$0xff] %v637
        %670 = vst [vmem:[%s188 + $0x80] sm:$0xff] %v638
        %671 = vst [vmem:[%s188 + $0x88] sm:$0xff] %v639
        %672 = vst [vmem:[%s188 + $0x90] sm:$0xff] %v640
        %673 = vst [vmem:[%s188 + $0x98] sm:$0xff] %v641
        %674 = vst [vmem:[%s188 + $0xa0] sm:$0xff] %v642
        %675 = vst [vmem:[%s188 + $0xa8] sm:$0xff] %v643
        %676 = vst [vmem:[%s188 + $0xb0] sm:$0xff] %v644
        %677 = vst [vmem:[%s188 + $0xb8] sm:$0xff] %v645
        %678 = vst [vmem:[%s188 + $0xc0] sm:$0xff] %v646
        %679 = vst [vmem:[%s188 + $0xc8] sm:$0xff] %v647
        %680 = vst [vmem:[%s188 + $0xd0] sm:$0xff] %v648
        %681 = vst [vmem:[%s188 + $0xd8] sm:$0xff] %v649
        %682 = vst [vmem:[%s188 + $0xe0] sm:$0xff] %v650
        %683 = vst [vmem:[%s188 + $0xe8] sm:$0xff] %v651
        %684 = vst [vmem:[%s188 + $0xf0] sm:$0xff] %v652
        %685 = vst [vmem:[%s188 + $0xf8] sm:$0xff] %v653
        %s686 = sand.u32 %s96, 1
        %s687 = scalar_lea.sflag [#allocation4], %s686
        %s688 = sand.u32 %s96, 1
        %s689 = smul.addr %s688, 256
        %s690 = scalar_lea.vmem [#allocation5], %s689
        // Predicated region
        $region37: #{tpu_custom_call.1} parent=31 // pred_check
          %p691 = pneg %p106
        $region38: #{tpu_custom_call.1} parent=31 // pred_check_branch
          %693 = sbr.rel (%p691) target = $region40
        $region39: #{tpu_custom_call.1} parent=31 // pred_region
          %s694 = smul.u32 32, %s20
          %s696 = ssub.s32 4096, 4096
          %697 = vsyncadd %s687, %s696
          %s698 = smul.addr %s694, 128
          %s699 = scalar_lea.hbm %s3, %s698
          %s700 = sshll.u32 %s690, 4
          %s701 = int_to_ptr.vmem [resolvable:$true] %s700
          %706 = dma.vmem_to_hbm [thread:$0]  %s701, 4096, %s699, %s687, 128, 128, 8
        $region40: #{tpu_custom_call.1} parent=31 // pred_fallthru
          _
      $region32: #{tpu_custom_call.1} parent=5 // pred_fallthru
        _
      %p707 = scmp.le.s32.totalorder 2, %s15
      // Predicated region
      $region41: #{tpu_custom_call.1} parent=5 // pred_check
        %p708 = pneg %p707
      $region42: #{tpu_custom_call.1} parent=5 // pred_check_branch
        %710 = sbr.rel (%p708) target = $region44
      $region43: #{tpu_custom_call.1} parent=5 // pred_region
        %s711 = ssub.s32 %s15, 2
        // Predicated region
        $region45: #{tpu_custom_call.1} parent=43 // pred_check
          %p712 = pneg %p112
        $region46: #{tpu_custom_call.1} parent=43 // pred_check_branch
          %714 = sbr.rel (%p712) target = $region48
        $region47: #{tpu_custom_call.1} parent=43 // pred_region
          %s715 = sand.u32 %s97, 1
          %s716 = scalar_lea.sflag [#allocation4], %s715
          %s717 = sand.u32 %s97, 1
          %s718 = smul.addr %s717, 256
          %s719 = scalar_lea.vmem [#allocation5], %s718
          %720 = dma.done %s716, 4096
        $region48: #{tpu_custom_call.1} parent=43 // pred_fallthru
          _
      $region44: #{tpu_custom_call.1} parent=5 // pred_fallthru
        _
    $region6: #{tpu_custom_call.1} parent=1 // loop_footer
      %s19 = sadd.s32 1, %s15
    $region7: #{tpu_custom_call.1} parent=1 // loop_footer_branch
      %14 = sbr.rel target = $region3
    $region8: #{tpu_custom_call.1} parent=1 // loop_exit
      _
    %721 = vsyncpa [#allocation3], 1
    %s722 = scalar_lea.sflag [#allocation3], 1
    %723 = vsyncpa %s722, 1
    %724 = vsyncpa [#allocation4], 1
    %s725 = scalar_lea.sflag [#allocation4], 1
    %726 = vsyncpa %s725, 1

</llo_original>
